<compile_context>
chip_gen: v5e
topology: v5e:2x2
jax: 0.10.0
libtpu: 0.0.40
codegen_flags: <defaults>
</compile_context>

<pallas_src>
import functools

import jax
import jax.numpy as jnp
from jax.experimental import pallas as pl
from jax.experimental.pallas import tpu as pltpu


def _label_smoothing_kernel(pred_ref, tgt_ref, out_ref, acc_ref, *,
                            num_classes, batch, tile_rows, smoothing,
                            confidence):
    pid = pl.program_id(0)
    nsteps = pl.num_programs(0)

    @pl.when(pid == 0)
    def _():
        acc_ref[...] = jnp.zeros_like(acc_ref)

    x = pred_ref[...].astype(jnp.float32)                 # (TN, C) logits
    tn, c = x.shape

    # Numerically-stable log-softmax pieces (per row).
    m = jnp.max(x, axis=-1, keepdims=True)                # (TN, 1)
    z = x - m
    lse = jnp.log(jnp.sum(jnp.exp(z), axis=-1, keepdims=True))   # (TN, 1)
    sum_z = jnp.sum(z, axis=-1, keepdims=True)                   # (TN, 1)

    # z at the target column via iota==target compare (scatter_ equivalent).
    col = jax.lax.broadcasted_iota(jnp.int32, (tn, c), 1)
    tgt = tgt_ref[...]                                    # (TN, 1) int32
    z_tgt = jnp.sum(jnp.where(col == tgt, z, 0.0), axis=-1, keepdims=True)

    # Algebraic form of sum_c(-true_dist * logp):
    #   -(off*(sum_z - C*lse) + (confidence - off)*(z_tgt - lse))
    off = smoothing / (num_classes - 1)
    per_row = -(off * (sum_z - num_classes * lse)
                + (confidence - off) * (z_tgt - lse))     # (TN, 1)

    # Mask rows of the (possibly padded) remainder tile.
    row = pid * tile_rows + jax.lax.broadcasted_iota(jnp.int32, (tn, 1), 0)
    per_row = jnp.where(row < batch, per_row, 0.0)

    acc_ref[...] += jnp.sum(per_row)

    @pl.when(pid == nsteps - 1)
    def _():
        out_ref[...] = acc_ref[...] / jnp.float32(batch)


def _choose_tile_rows(n, c, vmem_budget_bytes=40 * 1024 * 1024):
    # Double-buffered pred tile + (lane-padded to 128) int32 target column.
    bytes_per_row = 2 * (c * 4 + 128 * 4)
    tn = max(8, vmem_budget_bytes // bytes_per_row)
    tn = min(tn, 1024)                 # big enough to amortize per-step overhead
    tn = (tn // 8) * 8                 # keep the sublane constraint
    n_up = ((n + 7) // 8) * 8
    return max(8, min(tn, n_up))


def label_smoothing_loss(pred, target, *, smoothing=0.1, tile_rows=None):
    """pred: (N, C) float logits; target: (N,) int labels. Returns scalar loss."""
    n, c = pred.shape
    confidence = 1.0 - smoothing
    tgt2d = target.astype(jnp.int32).reshape(n, 1)

    if tile_rows is None:
        tile_rows = _choose_tile_rows(n, c)
    grid = (pl.cdiv(n, tile_rows),)

    kernel = functools.partial(
        _label_smoothing_kernel,
        num_classes=c,
        batch=n,
        tile_rows=tile_rows,
        smoothing=float(smoothing),
        confidence=float(confidence),
    )

    out = pl.pallas_call(
        kernel,
        out_shape=jax.ShapeDtypeStruct((1, 1), jnp.float32),
        grid=grid,
        in_specs=[
            pl.BlockSpec((tile_rows, c), lambda i: (i, 0)),
            pl.BlockSpec((tile_rows, 1), lambda i: (i, 0)),
        ],
        out_specs=pl.BlockSpec((1, 1), lambda i: (0, 0)),
        scratch_shapes=[pltpu.VMEM((1, 1), jnp.float32)],
        compiler_params=pltpu.CompilerParams(
            dimension_semantics=("arbitrary",),       # carried accumulator axis
            vmem_limit_bytes=48 * 1024 * 1024,        # headroom for v7x 64 MiB
        ),
    )(pred, tgt2d)
    return out[0, 0]


def _reference(pred, target, smoothing=0.1):
    c = pred.shape[-1]
    logp = jax.nn.log_softmax(pred.astype(jnp.float32), axis=-1)
    true_dist = jnp.full_like(logp, smoothing / (c - 1))
    true_dist = true_dist.at[jnp.arange(pred.shape[0]), target].set(1.0 - smoothing)
    return jnp.mean(jnp.sum(-true_dist * logp, axis=-1))


if __name__ == "__main__":
    smoothing = 0.1
    key = jax.random.PRNGKey(0)

    # Case 1: small shape consistent with the module (batch=8, classes=32).
    N, C = 8, 32
    k_pred, k_tgt, key = (*jax.random.split(key, 2), key)
    pred = jax.random.normal(k_pred, (N, C), dtype=jnp.float32)
    target = jax.random.randint(k_tgt, (N,), 0, C, dtype=jnp.int32)
    loss = jax.block_until_ready(label_smoothing_loss(pred, target, smoothing=smoothing))
    ref = _reference(pred, target, smoothing=smoothing)
    assert jnp.allclose(loss, ref, atol=1e-5, rtol=1e-5), (loss, ref)

    # Case 2: multi-tile grid with a ragged remainder tile (exercises the
    # accumulator + row masking paths); tile_rows forced small for the test.
    N2, C2 = 20, 32
    k_pred2, k_tgt2 = jax.random.split(jax.random.PRNGKey(1))
    pred2 = jax.random.normal(k_pred2, (N2, C2), dtype=jnp.float32)
    target2 = jax.random.randint(k_tgt2, (N2,), 0, C2, dtype=jnp.int32)
    loss2 = jax.block_until_ready(
        label_smoothing_loss(pred2, target2, smoothing=smoothing, tile_rows=8))
    ref2 = _reference(pred2, target2, smoothing=smoothing)
    assert jnp.allclose(loss2, ref2, atol=1e-5, rtol=1e-5), (loss2, ref2)

    print("KERNEL_OK")
</pallas_src>

<mosaic_0001>
module attributes {stable_mosaic.version = 11 : i64} {
  func.func @_label_smoothing_kernel(%arg0: i32, %arg1: memref<8x32xf32, #tpu.memory_space<vmem>>, %arg2: memref<8x1xi32, #tpu.memory_space<vmem>>, %arg3: memref<1x1xf32, #tpu.memory_space<vmem>>, %arg4: memref<1x1xf32, #tpu.memory_space<vmem>>) attributes {dimension_semantics = [#tpu.dimension_semantics<arbitrary>], iteration_bounds = array<i64: 1>, scalar_prefetch = 0 : i64, scratch_operands = 1 : i64, tpu.core_type = #tpu.core_type<tc>, window_params = [{transform_indices = @transform_0, window_bounds = array<i64: 8, 32>}, {transform_indices = @transform_1, window_bounds = array<i64: 8, 1>}, {pipeline_mode = #tpu.pipeline_mode<synchronous>, transform_indices = @transform_2, window_bounds = array<i64: 1, 1>}]} {
    %c0_i32 = arith.constant 0 : i32
    %0 = arith.cmpi eq, %arg0, %c0_i32 : i32
    %1 = arith.extui %0 : i1 to i32
    %c0_i32_0 = arith.constant 0 : i32
    %2 = arith.cmpi ne, %1, %c0_i32_0 : i32
    scf.if %2 {
      %cst_21 = arith.constant 0.000000e+00 : f32
      %52 = vector.broadcast %cst_21 : f32 to vector<1x1xf32>
      %c0_22 = arith.constant 0 : index
      %c0_23 = arith.constant 0 : index
      %53 = vector.load %arg4[%c0_22, %c0_23] : memref<1x1xf32, #tpu.memory_space<vmem>>, vector<1x1xf32>
      tpu.vector_store %arg4[%c0_22, %c0_23], %52 {strides = array<i32>} : memref<1x1xf32, #tpu.memory_space<vmem>>, vector<1x1xf32>,
    } else {
    }
    %c0 = arith.constant 0 : index
    %c0_1 = arith.constant 0 : index
    %3 = vector.load %arg1[%c0, %c0_1] : memref<8x32xf32, #tpu.memory_space<vmem>>, vector<8x32xf32>
    %cst = arith.constant dense<0xFF800000> : vector<8xf32>
    %4 = vector.multi_reduction <maximumf>, %3, %cst [1] : vector<8x32xf32> to vector<8xf32>
    %5 = vector.shape_cast %4 : vector<8xf32> to vector<8x1xf32>
    %6 = vector.broadcast %5 : vector<8x1xf32> to vector<8x32xf32>
    %7 = arith.subf %3, %6 : vector<8x32xf32>
    %8 = math.exp %7 : vector<8x32xf32>
    %cst_2 = arith.constant dense<0.000000e+00> : vector<8xf32>
    %9 = vector.multi_reduction <add>, %8, %cst_2 [1] : vector<8x32xf32> to vector<8xf32>
    %10 = vector.shape_cast %9 : vector<8xf32> to vector<8x1xf32>
    %11 = math.log %10 : vector<8x1xf32>
    %cst_3 = arith.constant dense<0.000000e+00> : vector<8xf32>
    %12 = vector.multi_reduction <add>, %7, %cst_3 [1] : vector<8x32xf32> to vector<8xf32>
    %13 = vector.shape_cast %12 : vector<8xf32> to vector<8x1xf32>
    %14 = tpu.iota {dimensions = array<i32: 1>} : vector<8x32xi32>
    %c0_4 = arith.constant 0 : index
    %c0_5 = arith.constant 0 : index
    %15 = vector.load %arg2[%c0_4, %c0_5] : memref<8x1xi32, #tpu.memory_space<vmem>>, vector<8x1xi32>
    %16 = vector.broadcast %15 : vector<8x1xi32> to vector<8x32xi32>
    %17 = arith.cmpi eq, %14, %16 : vector<8x32xi32>
    %cst_6 = arith.constant 0.000000e+00 : f32
    %18 = vector.broadcast %cst_6 : f32 to vector<8x32xf32>
    %19 = arith.select %17, %7, %18 : vector<8x32xi1>, vector<8x32xf32>
    %cst_7 = arith.constant dense<0.000000e+00> : vector<8xf32>
    %20 = vector.multi_reduction <add>, %19, %cst_7 [1] : vector<8x32xf32> to vector<8xf32>
    %21 = vector.shape_cast %20 : vector<8xf32> to vector<8x1xf32>
    %cst_8 = arith.constant 3.200000e+01 : f32
    %22 = vector.broadcast %cst_8 : f32 to vector<8x1xf32>
    %23 = arith.mulf %22, %11 : vector<8x1xf32>
    %24 = arith.subf %13, %23 : vector<8x1xf32>
    %cst_9 = arith.constant 0.0032258064 : f32
    %25 = vector.broadcast %cst_9 : f32 to vector<8x1xf32>
    %26 = arith.mulf %25, %24 : vector<8x1xf32>
    %27 = arith.subf %21, %11 : vector<8x1xf32>
    %cst_10 = arith.constant 0.896774172 : f32
    %28 = vector.broadcast %cst_10 : f32 to vector<8x1xf32>
    %29 = arith.mulf %28, %27 : vector<8x1xf32>
    %30 = arith.addf %26, %29 : vector<8x1xf32>
    %cst_11 = arith.constant 0.000000e+00 : f32
    %31 = vector.broadcast %cst_11 : f32 to vector<8x1xf32>
    %32 = arith.subf %31, %30 : vector<8x1xf32>
    %c8_i32 = arith.constant 8 : i32
    %33 = arith.muli %arg0, %c8_i32 : i32
    %34 = tpu.iota {dimensions = array<i32: 0>} : vector<8x1xi32>
    %35 = vector.broadcast %33 : i32 to vector<8x1xi32>
    %36 = arith.addi %35, %34 : vector<8x1xi32>
    %c8_i32_12 = arith.constant 8 : i32
    %37 = vector.broadcast %c8_i32_12 : i32 to vector<8x1xi32>
    %38 = arith.cmpi slt, %36, %37 : vector<8x1xi32>
    %cst_13 = arith.constant 0.000000e+00 : f32
    %39 = vector.broadcast %cst_13 : f32 to vector<8x1xf32>
    %40 = arith.select %38, %32, %39 : vector<8x1xi1>, vector<8x1xf32>
    %c0_14 = arith.constant 0 : index
    %c0_15 = arith.constant 0 : index
    %41 = vector.load %arg4[%c0_14, %c0_15] : memref<1x1xf32, #tpu.memory_space<vmem>>, vector<1x1xf32>
    %42 = vector.shape_cast %40 : vector<8x1xf32> to vector<1x8x1xf32>
    %cst_16 = arith.constant dense<0.000000e+00> : vector<1xf32>
    %43 = vector.multi_reduction <add>, %42, %cst_16 [1, 2] : vector<1x8x1xf32> to vector<1xf32>
    %44 = vector.shape_cast %43 : vector<1xf32> to vector<1x1x1xf32>
    %45 = vector.extract %44[0, 0, 0] : f32 from vector<1x1x1xf32>
    %46 = vector.broadcast %45 : f32 to vector<1x1xf32>
    %47 = arith.addf %41, %46 : vector<1x1xf32>
    %c0_17 = arith.constant 0 : index
    %c0_18 = arith.constant 0 : index
    %48 = vector.load %arg4[%c0_17, %c0_18] : memref<1x1xf32, #tpu.memory_space<vmem>>, vector<1x1xf32>
    tpu.vector_store %arg4[%c0_17, %c0_18], %47 {strides = array<i32>} : memref<1x1xf32, #tpu.memory_space<vmem>>, vector<1x1xf32>,
    %c0_i32_19 = arith.constant 0 : i32
    %49 = arith.cmpi eq, %arg0, %c0_i32_19 : i32
    %50 = arith.extui %49 : i1 to i32
    %c0_i32_20 = arith.constant 0 : i32
    %51 = arith.cmpi ne, %50, %c0_i32_20 : i32
    scf.if %51 {
      %c0_21 = arith.constant 0 : index
      %c0_22 = arith.constant 0 : index
      %52 = vector.load %arg4[%c0_21, %c0_22] : memref<1x1xf32, #tpu.memory_space<vmem>>, vector<1x1xf32>
      %cst_23 = arith.constant 8.000000e+00 : f32
      %53 = vector.broadcast %cst_23 : f32 to vector<1x1xf32>
      %54 = arith.divf %52, %53 : vector<1x1xf32>
      %c0_24 = arith.constant 0 : index
      %c0_25 = arith.constant 0 : index
      %55 = vector.load %arg3[%c0_24, %c0_25] : memref<1x1xf32, #tpu.memory_space<vmem>>, vector<1x1xf32>
      tpu.vector_store %arg3[%c0_24, %c0_25], %54 {strides = array<i32>} : memref<1x1xf32, #tpu.memory_space<vmem>>, vector<1x1xf32>,
    } else {
    }
    return
  }
  func.func @transform_0(%arg0: i32) -> (i32, i32) {
    %c0_i32 = arith.constant 0 : i32
    %c0_i32_0 = arith.constant 0 : i32
    return %arg0, %c0_i32 : i32, i32
  }
  func.func @transform_1(%arg0: i32) -> (i32, i32) {
    %c0_i32 = arith.constant 0 : i32
    %c0_i32_0 = arith.constant 0 : i32
    return %arg0, %c0_i32 : i32, i32
  }
  func.func @transform_2(%arg0: i32) -> (i32, i32) {
    %c0_i32 = arith.constant 0 : i32
    %c0_i32_0 = arith.constant 0 : i32
    %c0_i32_1 = arith.constant 0 : i32
    return %c0_i32, %c0_i32_0 : i32, i32
  }
}

</mosaic_0001>

<llo_original>
// kernel: tpu_custom_call.1
$region0: #{tpu_custom_call.1}
  #allocation0 [shape = 'u32[]', space=smem, size = 0x4, offset = 0x4, fixed_abs, tag = 'smem constant byte address 0x4 - core index']
  #allocation1 [shape = 'u32[72,128]{1,0:T(1,128)}', space=vmem, size = 0x9000, scoped, tag = 'internal scratch']
  #allocation2 [shape = 'f32[1,1]{1,0:T(1,128)}', space=vmem, size = 0x200, scoped, tag = 'scratch operand']
  %s0 = inlined_call_operand.vmem [shape: f32[8,32], index: 0, kind: input, shape index: {}]
  %s1 = inlined_call_operand.vmem [shape: s32[8,1], index: 1, kind: input, shape index: {}]
  %s2 = inlined_call_operand.hbm [shape: f32[1,1], index: 2, kind: output, shape index: {}]
  %s3 = sld [smem:[#allocation0]]
  $region26: #{tpu_custom_call.1} parent=0
    _
  %s5 = ssub.s32 1, %s3
  %s6 = scalar_select 0, %s5, %s3
  $region1: #{tpu_custom_call.1} parent=0
    #allocation3 [shape = 'u8[512]{0}', space=vmem, size = 0x400, scoped, tag = 'output window, operand 0, single buffered']
    #allocation4 [shape = 's32[1]{0}', space=sflag, size = 0x4, scoped, tag = 'scoped memory for tpu_custom_call.1']
    %7 = vsyncpa [#allocation4], 0
    // Predicated region
    $region2: #{tpu_custom_call.1} parent=1 // pred_check
      _
    $region3: #{tpu_custom_call.1} parent=1 // pred_check_branch
      %9 = sbr.rel (0) target = $region5
    $region4: #{tpu_custom_call.1} parent=1 // pred_region
      _
    $region5: #{tpu_custom_call.1} parent=1 // pred_fallthru
      _
    // Predicated region
    $region6: #{tpu_custom_call.1} parent=1 // pred_check
      _
    $region7: #{tpu_custom_call.1} parent=1 // pred_check_branch
      %11 = sbr.rel (0) target = $region9
    $region8: #{tpu_custom_call.1} parent=1 // pred_region
      _
    $region9: #{tpu_custom_call.1} parent=1 // pred_fallthru
      _
    %p12 = scmp.eq.s32.totalorder 0, 0
    // Predicated region
    $region10: #{tpu_custom_call.1} parent=1 // pred_check
      %p13 = pneg %p12
    $region11: #{tpu_custom_call.1} parent=1 // pred_check_branch
      %15 = sbr.rel (%p13) target = $region13
    $region12: #{tpu_custom_call.1} parent=1 // pred_region
      %vm16 = vcmask 0
      %17 = vst.msk [vmem:[#allocation2] sm:$0x1] %vm16, 0.0
    $region13: #{tpu_custom_call.1} parent=1 // pred_fallthru
      _
    %v18 = vld [vmem:[%s0] sm:$0xff]
    %vm19 = vcmask 261120
    %v20 = vsel %vm19, %v18, -inf
    %21 = vmax.xlane.f32.xlu0 %v20
    %v22 = vpop.xlane.xlu0 %21
    %v23 = vsub.f32 %v18, %v22
    %v24 = vmul.f32 %v23, 1.442695
    %v25 = vpow.pop %v24
    %v26 = vsel %vm19, %v25, 0.0
    %27 = vadd.xlane.f32.xlu0 %v26
    %v28 = vpop.xlane.xlu0 %27
    %v29 = vlog2.pop %v28
    %v30 = vmul.f32 %v29, 0.6931472
    %v31 = vsel %vm19, %v23, 0.0
    %32 = vadd.xlane.f32.xlu0 %v31
    %v33 = vpop.xlane.xlu0 %32
    %v34 = vlaneseq
    %v35 = vand.u32 %v34, 127
    %v36 = vld [vmem:[%s1] sm:$0xff]
    %37 = vset.pattern.permute.xlu0 0
    %38 = vperm.xlu0 %37, %v36
    %v39 = vpop.permute.xlu0 %38
    %vm40 = vcmp.eq.s32.totalorder %v35, %v39
    %v41 = vsel %vm40, %v23, 0.0
    %v42 = vsel %vm19, %v41, 0.0
    %43 = vadd.xlane.f32.xlu0 %v42
    %v44 = vpop.xlane.xlu0 %43
    %v45 = vmul.f32 %v30, 32.0
    %v46 = vsub.f32 %v33, %v45
    %v47 = vmul.f32 %v46, 0.0032258064
    %v48 = vsub.f32 %v44, %v30
    %v49 = vmul.f32 %v48, 0.8967742
    %v50 = vadd.f32 %v47, %v49
    %v51 = vsub.f32 0.0, %v50
    %s52 = smul.u32 0, 8
    %v53 = vlaneseq
    %v54 = vshrl.u32 %v53, 7
    %v55 = vstv %s52
    %v56 = vadd.s32 %v55, %v54
    %vm57 = vcmp.lt.s32.totalorder %v56, 8
    %v58 = vsel %vm57, %v51, 0.0
    %v59 = vld [vmem:[#allocation2] sm:$0x1]
    %vm60 = vcmask 7168
    %v61 = vsel %vm60, %v58, 0.0
    %62 = vadd.xlane.f32.xlu0 %v61
    %v63 = vpop.xlane.xlu0 %62
    %v64 = vrot.slane %v63, 4
    %v65 = vadd.f32 %v63, %v64
    %v66 = vrot.slane %v65, 2
    %v67 = vadd.f32 %v65, %v66
    %v68 = vrot.slane %v67, 1
    %v69 = vadd.f32 %v67, %v68
    %s70 = vtos %v69
    %v71 = vstv %s70
    %v72 = vadd.f32 %v59, %v71
    %vm73 = vcmask 0
    %74 = vst.msk [vmem:[#allocation2] sm:$0x1] %vm73, %v72
    // Predicated region
    $region14: #{tpu_custom_call.1} parent=1 // pred_check
      %p75 = pneg %p12
    $region15: #{tpu_custom_call.1} parent=1 // pred_check_branch
      %77 = sbr.rel (%p75) target = $region17
    $region16: #{tpu_custom_call.1} parent=1 // pred_region
      %v78 = vld [vmem:[#allocation2] sm:$0x1]
      %v79 = vrcp.pop 8.0
      %v80 = vmul.f32 8.0, %v79
      %v81 = vsub.f32 1.0, %v80
      %v82 = vmul.f32 %v79, %v81
      %v83 = vadd.f32 %v79, %v82
      %vm84 = vweird.f32 %v79
      %v85 = vsel %vm84, %v79, %v83
      %v86 = vmul.f32 %v78, %v85
      %87 = vst.msk [vmem:[#allocation3] sm:$0x1] %vm73, %v86
    $region17: #{tpu_custom_call.1} parent=1 // pred_fallthru
      _
    // Predicated region
    $region18: #{tpu_custom_call.1} parent=1 // pred_check
      _
    $region19: #{tpu_custom_call.1} parent=1 // pred_check_branch
      %89 = sbr.rel (0) target = $region21
    $region20: #{tpu_custom_call.1} parent=1 // pred_region
      %91 = vsyncadd [#allocation4], 0
      %s93 = sshll.u32 [#allocation3], 4
      %s94 = int_to_ptr.vmem [resolvable:$true] %s93
      %s95 = sshll.u32 %s2, 4
      %s96 = int_to_ptr.hbm [resolvable:$true] %s95
      %98 = dma.vmem_to_hbm [thread:$0]  %s94, 16, %s96, [#allocation4]
    $region21: #{tpu_custom_call.1} parent=1 // pred_fallthru
      _
    // Predicated region
    $region22: #{tpu_custom_call.1} parent=1 // pred_check
      _
    $region23: #{tpu_custom_call.1} parent=1 // pred_check_branch
      %100 = sbr.rel (0) target = $region25
    $region24: #{tpu_custom_call.1} parent=1 // pred_region
      %102 = dma.done [#allocation4], 16
    $region25: #{tpu_custom_call.1} parent=1 // pred_fallthru
      _
    %103 = vsyncpa [#allocation4], 1

</llo_original>
